<compile_context>
chip_gen: v5e
topology: v5e:2x2
jax: 0.10.0
libtpu: 0.0.40
codegen_flags: <defaults>
</compile_context>

<pallas_src>
import jax
import jax.numpy as jnp
from jax.experimental import pallas as pl
from jax.experimental.pallas import tpu as pltpu

SEQ = 70
HID = 1104

# Below this total *input* size the whole problem is held as one resident VMEM
# block (no grid).  in + out + pos then totals <= ~8.6 MiB -> safe everywhere.
_SINGLE_BLOCK_BYTES = 4 * 1024 * 1024

# v7x has 2 TensorCores per chip sharding a "parallel" grid axis; choosing a
# step count that is a multiple of this keeps the split balanced (harmless on
# the 1-TC v5e / v6e chips).
_NUM_TENSORCORES = 2

# Scoped-VMEM limit for the tiled path.  Budget at tb_max is ~20 MiB
# ((4*tb + 2) * ~304 KiB sublane-dense slabs): above v5e's 16 MiB scoped
# default, far below physical VMEM on every generation and v7x's 32 MiB cap.
_VMEM_LIMIT_BYTES = 28 * 1024 * 1024


def _add_pos_kernel(x_ref, pos_ref, o_ref):
    # (tb, sub, N) + (1, sub, N): elementwise add with an in-register
    # broadcast over the leading (batch) dim.  Purely VPU work in a
    # memory-bound kernel -> effectively free.
    o_ref[...] = x_ref[...] + pos_ref[...]


def _sublane_factor(sd, itemsize):
    """Middle-dim size for the sublane-dense (B, sub, sd // sub) layout."""
    native = max(8, 8 * (4 // max(1, itemsize)))  # 8 f32 / 16 bf16 / 32 int8
    if sd % native == 0:
        return native
    if sd % 8 == 0:
        return 8
    return 1  # degenerate fallback: sublane-padded but still correct


def _pick_batch_tile(batch, tb_max):
    """Batch rows per grid step, balanced across TensorCores (v7x)."""
    steps = pl.cdiv(batch, tb_max)
    # Round the step count up to a multiple of the TC count so the "parallel"
    # grid axis shards evenly (for large grids the residual imbalance is
    # negligible anyway).
    steps = pl.cdiv(steps, _NUM_TENSORCORES) * _NUM_TENSORCORES
    return pl.cdiv(batch, steps)


def learned_positional_encoding2(x, position_embeddings):
    """x: (B, S, D); position_embeddings: (1, S, D).  Returns x + pos."""
    B, S, D = x.shape
    assert position_embeddings.shape == (1, S, D)
    assert position_embeddings.dtype == x.dtype
    SD = S * D
    itemsize = x.dtype.itemsize

    # Row-major (copy-free) collapse to a sublane/lane-dense 3D layout.
    sub = _sublane_factor(SD, itemsize)
    N = SD // sub
    x3 = x.reshape(B, sub, N)
    pos3 = position_embeddings.reshape(1, sub, N)

    cost = pl.CostEstimate(
        flops=B * SD,
        bytes_accessed=(2 * B * SD + SD) * itemsize,
        transcendentals=0,
    )

    total_in_bytes = B * SD * itemsize
    if total_in_bytes <= _SINGLE_BLOCK_BYTES:
        # Single resident block: no pipeline, no per-step overhead.
        out3 = pl.pallas_call(
            _add_pos_kernel,
            out_shape=jax.ShapeDtypeStruct((B, sub, N), x.dtype),
            input_output_aliases={0: 0},  # out aliases x (donate x under jit)
            cost_estimate=cost,
            compiler_params=pltpu.CompilerParams(
                vmem_limit_bytes=_VMEM_LIMIT_BYTES,
            ),
        )(x3, pos3)
    else:
        # tb_max keeps the double-buffered budget ~20 MiB regardless of dtype.
        tb_max = 16 * (4 // itemsize) if itemsize <= 4 else 16
        tb = _pick_batch_tile(B, tb_max)
        grid = (pl.cdiv(B, tb),)
        out3 = pl.pallas_call(
            _add_pos_kernel,
            out_shape=jax.ShapeDtypeStruct((B, sub, N), x.dtype),
            grid_spec=pltpu.PrefetchScalarGridSpec(
                num_scalar_prefetch=0,
                grid=grid,
                in_specs=[
                    # tb batch rows of x per step; last two block dims equal
                    # the full array dims -> dense, unmasked vector stores.
                    pl.BlockSpec((tb, sub, N), lambda b: (b, 0, 0)),
                    # Constant block index -> the (~0.3 MB, sublane-dense)
                    # pos block stays resident instead of re-streaming.
                    pl.BlockSpec((1, sub, N), lambda b: (0, 0, 0)),
                ],
                out_specs=pl.BlockSpec((tb, sub, N), lambda b: (b, 0, 0)),
            ),
            input_output_aliases={0: 0},  # out aliases x (donate x under jit)
            cost_estimate=cost,
            compiler_params=pltpu.CompilerParams(
                dimension_semantics=("parallel",),
                vmem_limit_bytes=_VMEM_LIMIT_BYTES,
            ),
        )(x3, pos3)

    return out3.reshape(B, S, D)


# Recommended entry point: donating x lets XLA honour the in-place aliasing
# (x += pos) without a defensive copy of the B*S*D HBM buffer.
learned_positional_encoding2_jit = jax.jit(
    learned_positional_encoding2, donate_argnums=(0,)
)


if __name__ == "__main__":
    key = jax.random.PRNGKey(0)
    kp, kx1, kx2, kx3 = jax.random.split(key, 4)

    # nn.Parameter(torch.zeros(1, 70, 1104)) -- deterministic nonzero values so
    # the add is observable; shape matches the module exactly.
    pos_f32 = 0.02 * jax.random.normal(kp, (1, SEQ, HID), dtype=jnp.float32)

    # 1) Small batch (module's typical call): single resident block, eager call.
    B_small = 2
    x_small = jax.random.normal(kx1, (B_small, SEQ, HID), dtype=jnp.float32)
    ref_small = x_small + pos_f32  # reference computed BEFORE the kernel call
    out_small = jax.block_until_ready(
        learned_positional_encoding2(x_small, pos_f32)
    )
    assert out_small.shape == (B_small, SEQ, HID)
    assert out_small.dtype == jnp.float32
    assert jnp.allclose(out_small, ref_small, atol=1e-6), "mismatch (single-block)"

    # 2) Larger batch, f32: tiled path (tb=12, grid=2 -> even TC split),
    #    jitted with x donated so the in-place aliasing is honoured.
    B_big = 24
    x_big = jax.random.normal(kx2, (B_big, SEQ, HID), dtype=jnp.float32)
    ref_big = x_big + pos_f32
    out_big = jax.block_until_ready(
        learned_positional_encoding2_jit(x_big, pos_f32)
    )
    del x_big  # donated: must not be reused
    assert out_big.shape == (B_big, SEQ, HID)
    assert jnp.allclose(out_big, ref_big, atol=1e-6), "mismatch (tiled f32)"

    # 3) bf16: exercises the dtype-dependent sublane factor (16) and tile size
    #    (tb=17, grid=2).  Halved itemsize is the single largest win for this
    #    HBM-bandwidth-bound op when the surrounding model runs in bf16.
    B_bf16 = 34
    pos_bf16 = pos_f32.astype(jnp.bfloat16)
    x_bf16 = jax.random.normal(kx3, (B_bf16, SEQ, HID), dtype=jnp.bfloat16)
    ref_bf16 = x_bf16 + pos_bf16
    out_bf16 = jax.block_until_ready(
        learned_positional_encoding2_jit(x_bf16, pos_bf16)
    )
    del x_bf16  # donated: must not be reused
    assert out_bf16.shape == (B_bf16, SEQ, HID)
    assert out_bf16.dtype == jnp.bfloat16
    assert jnp.allclose(
        out_bf16.astype(jnp.float32), ref_bf16.astype(jnp.float32),
        atol=1e-2, rtol=1e-2,
    ), "mismatch (tiled bf16)"

    print("KERNEL_OK")
</pallas_src>

<mosaic_0001>
module attributes {stable_mosaic.version = 11 : i64} {
  func.func @_add_pos_kernel(%arg0: memref<2x8x9660xf32, #tpu.memory_space<vmem>>, %arg1: memref<1x8x9660xf32, #tpu.memory_space<vmem>>, %arg2: memref<2x8x9660xf32, #tpu.memory_space<vmem>>) attributes {dimension_semantics = [], scalar_prefetch = 0 : i64, scratch_operands = 0 : i64, tpu.core_type = #tpu.core_type<tc>} {
    %c0 = arith.constant 0 : index
    %c0_0 = arith.constant 0 : index
    %c0_1 = arith.constant 0 : index
    %0 = vector.load %arg0[%c0, %c0_0, %c0_1] : memref<2x8x9660xf32, #tpu.memory_space<vmem>>, vector<2x8x9660xf32>
    %c0_2 = arith.constant 0 : index
    %c0_3 = arith.constant 0 : index
    %c0_4 = arith.constant 0 : index
    %1 = vector.load %arg1[%c0_2, %c0_3, %c0_4] : memref<1x8x9660xf32, #tpu.memory_space<vmem>>, vector<1x8x9660xf32>
    %2 = vector.broadcast %1 : vector<1x8x9660xf32> to vector<2x8x9660xf32>
    %3 = arith.addf %0, %2 : vector<2x8x9660xf32>
    %c0_5 = arith.constant 0 : index
    %c0_6 = arith.constant 0 : index
    %c0_7 = arith.constant 0 : index
    %4 = vector.load %arg2[%c0_5, %c0_6, %c0_7] : memref<2x8x9660xf32, #tpu.memory_space<vmem>>, vector<2x8x9660xf32>
    tpu.vector_store %arg2[%c0_5, %c0_6, %c0_7], %3 {strides = array<i32>} : memref<2x8x9660xf32, #tpu.memory_space<vmem>>, vector<2x8x9660xf32>,
    return
  }
}

</mosaic_0001>

<llo_original>
// kernel: tpu_custom_call.1
$region0: #{tpu_custom_call.1}
  #allocation0 [shape = 'u32[]', space=smem, size = 0x4, offset = 0x4, fixed_abs, tag = 'smem constant byte address 0x4 - core index']
  #allocation1 [shape = 'u32[72,128]{1,0:T(1,128)}', space=vmem, size = 0x9000, scoped, tag = 'internal scratch']
  %s0 = inlined_call_operand.hbm [shape: f32[2,8,9660], index: 0, kind: input, shape index: {}, may-alias: {0,2}]
  %s1 = inlined_call_operand.vmem [shape: f32[1,8,9660], index: 1, kind: input, shape index: {}]
  %s2 = inlined_call_operand.hbm [shape: f32[2,8,9660], index: 2, kind: output, shape index: {}, may-alias: {0,2}]
  %s3 = sld [smem:[#allocation0]]
  $region22: #{tpu_custom_call.1} parent=0
    _
  %s5 = ssub.s32 1, %s3
  %s6 = scalar_select 0, %s5, %s3
  $region1: #{tpu_custom_call.1} parent=0
    #allocation2 [shape = 'u8[622592]{0}', space=vmem, size = 0x98000, scoped, tag = 'input window, operand 0, single buffered']
    #allocation3 [shape = 's32[1]{0}', space=sflag, size = 0x4, scoped, tag = 'scoped memory for tpu_custom_call.1']
    #allocation4 [shape = 's32[1]{0}', space=sflag, size = 0x4, scoped, tag = 'scoped memory for tpu_custom_call.1']
    #allocation5 [shape = 'u8[622592]{0}', space=vmem, size = 0x98000, scoped, tag = 'output window, operand 0, single buffered']
    %7 = vsyncpa [#allocation3], 0
    %8 = vsyncpa [#allocation4], 0
    // Predicated region
    $region2: #{tpu_custom_call.1} parent=1 // pred_check
      _
    $region3: #{tpu_custom_call.1} parent=1 // pred_check_branch
      %10 = sbr.rel (0) target = $region5
    $region4: #{tpu_custom_call.1} parent=1 // pred_region
      %12 = vsyncadd [#allocation3], 0
      %s13 = sshll.u32 %s0, 4
      %s14 = int_to_ptr.hbm [resolvable:$true] %s13
      %s15 = sshll.u32 [#allocation2], 4
      %s16 = int_to_ptr.vmem [resolvable:$true] %s15
      %21 = dma.hbm_to_vmem [thread:$0]  %s14, 19456, %s16, [#allocation3], 9728, 9728, 608
    $region5: #{tpu_custom_call.1} parent=1 // pred_fallthru
      _
    // Predicated region
    $region6: #{tpu_custom_call.1} parent=1 // pred_check
      _
    $region7: #{tpu_custom_call.1} parent=1 // pred_check_branch
      %23 = sbr.rel (0) target = $region9
    $region8: #{tpu_custom_call.1} parent=1 // pred_region
      _
    $region9: #{tpu_custom_call.1} parent=1 // pred_fallthru
      _
    // Predicated region
    $region10: #{tpu_custom_call.1} parent=1 // pred_check
      _
    $region11: #{tpu_custom_call.1} parent=1 // pred_check_branch
      %25 = sbr.rel (0) target = $region13
    $region12: #{tpu_custom_call.1} parent=1 // pred_region
      %27 = dma.done [#allocation3], 19456
    $region13: #{tpu_custom_call.1} parent=1 // pred_fallthru
      _
    %v28 = vld [vmem:[#allocation2] sm:$0xff]
    %v29 = vld [vmem:[#allocation2 + $0x8] sm:$0xff]
    %v30 = vld [vmem:[#allocation2 + $0x10] sm:$0xff]
    %v31 = vld [vmem:[#allocation2 + $0x18] sm:$0xff]
    %v32 = vld [vmem:[#allocation2 + $0x20] sm:$0xff]
    %v33 = vld [vmem:[#allocation2 + $0x28] sm:$0xff]
    %v34 = vld [vmem:[#allocation2 + $0x30] sm:$0xff]
    %v35 = vld [vmem:[#allocation2 + $0x38] sm:$0xff]
    %v36 = vld [vmem:[#allocation2 + $0x40] sm:$0xff]
    %v37 = vld [vmem:[#allocation2 + $0x48] sm:$0xff]
    %v38 = vld [vmem:[#allocation2 + $0x50] sm:$0xff]
    %v39 = vld [vmem:[#allocation2 + $0x58] sm:$0xff]
    %v40 = vld [vmem:[#allocation2 + $0x60] sm:$0xff]
    %v41 = vld [vmem:[#allocation2 + $0x68] sm:$0xff]
    %v42 = vld [vmem:[#allocation2 + $0x70] sm:$0xff]
    %v43 = vld [vmem:[#allocation2 + $0x78] sm:$0xff]
    %v44 = vld [vmem:[#allocation2 + $0x80] sm:$0xff]
    %v45 = vld [vmem:[#allocation2 + $0x88] sm:$0xff]
    %v46 = vld [vmem:[#allocation2 + $0x90] sm:$0xff]
    %v47 = vld [vmem:[#allocation2 + $0x98] sm:$0xff]
    %v48 = vld [vmem:[#allocation2 + $0xa0] sm:$0xff]
    %v49 = vld [vmem:[#allocation2 + $0xa8] sm:$0xff]
    %v50 = vld [vmem:[#allocation2 + $0xb0] sm:$0xff]
    %v51 = vld [vmem:[#allocation2 + $0xb8] sm:$0xff]
    %v52 = vld [vmem:[#allocation2 + $0xc0] sm:$0xff]
    %v53 = vld [vmem:[#allocation2 + $0xc8] sm:$0xff]
    %v54 = vld [vmem:[#allocation2 + $0xd0] sm:$0xff]
    %v55 = vld [vmem:[#allocation2 + $0xd8] sm:$0xff]
    %v56 = vld [vmem:[#allocation2 + $0xe0] sm:$0xff]
    %v57 = vld [vmem:[#allocation2 + $0xe8] sm:$0xff]
    %v58 = vld [vmem:[#allocation2 + $0xf0] sm:$0xff]
    %v59 = vld [vmem:[#allocation2 + $0xf8] sm:$0xff]
    %v60 = vld [vmem:[#allocation2 + $0x100] sm:$0xff]
    %v61 = vld [vmem:[#allocation2 + $0x108] sm:$0xff]
    %v62 = vld [vmem:[#allocation2 + $0x110] sm:$0xff]
    %v63 = vld [vmem:[#allocation2 + $0x118] sm:$0xff]
    %v64 = vld [vmem:[#allocation2 + $0x120] sm:$0xff]
    %v65 = vld [vmem:[#allocation2 + $0x128] sm:$0xff]
    %v66 = vld [vmem:[#allocation2 + $0x130] sm:$0xff]
    %v67 = vld [vmem:[#allocation2 + $0x138] sm:$0xff]
    %v68 = vld [vmem:[#allocation2 + $0x140] sm:$0xff]
    %v69 = vld [vmem:[#allocation2 + $0x148] sm:$0xff]
    %v70 = vld [vmem:[#allocation2 + $0x150] sm:$0xff]
    %v71 = vld [vmem:[#allocation2 + $0x158] sm:$0xff]
    %v72 = vld [vmem:[#allocation2 + $0x160] sm:$0xff]
    %v73 = vld [vmem:[#allocation2 + $0x168] sm:$0xff]
    %v74 = vld [vmem:[#allocation2 + $0x170] sm:$0xff]
    %v75 = vld [vmem:[#allocation2 + $0x178] sm:$0xff]
    %v76 = vld [vmem:[#allocation2 + $0x180] sm:$0xff]
    %v77 = vld [vmem:[#allocation2 + $0x188] sm:$0xff]
    %v78 = vld [vmem:[#allocation2 + $0x190] sm:$0xff]
    %v79 = vld [vmem:[#allocation2 + $0x198] sm:$0xff]
    %v80 = vld [vmem:[#allocation2 + $0x1a0] sm:$0xff]
    %v81 = vld [vmem:[#allocation2 + $0x1a8] sm:$0xff]
    %v82 = vld [vmem:[#allocation2 + $0x1b0] sm:$0xff]
    %v83 = vld [vmem:[#allocation2 + $0x1b8] sm:$0xff]
    %v84 = vld [vmem:[#allocation2 + $0x1c0] sm:$0xff]
    %v85 = vld [vmem:[#allocation2 + $0x1c8] sm:$0xff]
    %v86 = vld [vmem:[#allocation2 + $0x1d0] sm:$0xff]
    %v87 = vld [vmem:[#allocation2 + $0x1d8] sm:$0xff]
    %v88 = vld [vmem:[#allocation2 + $0x1e0] sm:$0xff]
    %v89 = vld [vmem:[#allocation2 + $0x1e8] sm:$0xff]
    %v90 = vld [vmem:[#allocation2 + $0x1f0] sm:$0xff]
    %v91 = vld [vmem:[#allocation2 + $0x1f8] sm:$0xff]
    %v92 = vld [vmem:[#allocation2 + $0x200] sm:$0xff]
    %v93 = vld [vmem:[#allocation2 + $0x208] sm:$0xff]
    %v94 = vld [vmem:[#allocation2 + $0x210] sm:$0xff]
    %v95 = vld [vmem:[#allocation2 + $0x218] sm:$0xff]
    %v96 = vld [vmem:[#allocation2 + $0x220] sm:$0xff]
    %v97 = vld [vmem:[#allocation2 + $0x228] sm:$0xff]
    %v98 = vld [vmem:[#allocation2 + $0x230] sm:$0xff]
    %v99 = vld [vmem:[#allocation2 + $0x238] sm:$0xff]
    %v100 = vld [vmem:[#allocation2 + $0x240] sm:$0xff]
    %v101 = vld [vmem:[#allocation2 + $0x248] sm:$0xff]
    %v102 = vld [vmem:[#allocation2 + $0x250] sm:$0xff]
    %v103 = vld [vmem:[#allocation2 + $0x258] sm:$0xff]
    %v104 = vld [vmem:[#allocation2 + $0x260] sm:$0xff]
    %v105 = vld [vmem:[#allocation2 + $0x268] sm:$0xff]
    %v106 = vld [vmem:[#allocation2 + $0x270] sm:$0xff]
    %v107 = vld [vmem:[#allocation2 + $0x278] sm:$0xff]
    %v108 = vld [vmem:[#allocation2 + $0x280] sm:$0xff]
    %v109 = vld [vmem:[#allocation2 + $0x288] sm:$0xff]
    %v110 = vld [vmem:[#allocation2 + $0x290] sm:$0xff]
    %v111 = vld [vmem:[#allocation2 + $0x298] sm:$0xff]
    %v112 = vld [vmem:[#allocation2 + $0x2a0] sm:$0xff]
    %v113 = vld [vmem:[#allocation2 + $0x2a8] sm:$0xff]
    %v114 = vld [vmem:[#allocation2 + $0x2b0] sm:$0xff]
    %v115 = vld [vmem:[#allocation2 + $0x2b8] sm:$0xff]
    %v116 = vld [vmem:[#allocation2 + $0x2c0] sm:$0xff]
    %v117 = vld [vmem:[#allocation2 + $0x2c8] sm:$0xff]
    %v118 = vld [vmem:[#allocation2 + $0x2d0] sm:$0xff]
    %v119 = vld [vmem:[#allocation2 + $0x2d8] sm:$0xff]
    %v120 = vld [vmem:[#allocation2 + $0x2e0] sm:$0xff]
    %v121 = vld [vmem:[#allocation2 + $0x2e8] sm:$0xff]
    %v122 = vld [vmem:[#allocation2 + $0x2f0] sm:$0xff]
    %v123 = vld [vmem:[#allocation2 + $0x2f8] sm:$0xff]
    %v124 = vld [vmem:[#allocation2 + $0x300] sm:$0xff]
    %v125 = vld [vmem:[#allocation2 + $0x308] sm:$0xff]
    %v126 = vld [vmem:[#allocation2 + $0x310] sm:$0xff]
    %v127 = vld [vmem:[#allocation2 + $0x318] sm:$0xff]
    %v128 = vld [vmem:[#allocation2 + $0x320] sm:$0xff]
    %v129 = vld [vmem:[#allocation2 + $0x328] sm:$0xff]
    %v130 = vld [vmem:[#allocation2 + $0x330] sm:$0xff]
    %v131 = vld [vmem:[#allocation2 + $0x338] sm:$0xff]
    %v132 = vld [vmem:[#allocation2 + $0x340] sm:$0xff]
    %v133 = vld [vmem:[#allocation2 + $0x348] sm:$0xff]
    %v134 = vld [vmem:[#allocation2 + $0x350] sm:$0xff]
    %v135 = vld [vmem:[#allocation2 + $0x358] sm:$0xff]
    %v136 = vld [vmem:[#allocation2 + $0x360] sm:$0xff]
    %v137 = vld [vmem:[#allocation2 + $0x368] sm:$0xff]
    %v138 = vld [vmem:[#allocation2 + $0x370] sm:$0xff]
    %v139 = vld [vmem:[#allocation2 + $0x378] sm:$0xff]
    %v140 = vld [vmem:[#allocation2 + $0x380] sm:$0xff]
    %v141 = vld [vmem:[#allocation2 + $0x388] sm:$0xff]
    %v142 = vld [vmem:[#allocation2 + $0x390] sm:$0xff]
    %v143 = vld [vmem:[#allocation2 + $0x398] sm:$0xff]
    %v144 = vld [vmem:[#allocation2 + $0x3a0] sm:$0xff]
    %v145 = vld [vmem:[#allocation2 + $0x3a8] sm:$0xff]
    %v146 = vld [vmem:[#allocation2 + $0x3b0] sm:$0xff]
    %v147 = vld [vmem:[#allocation2 + $0x3b8] sm:$0xff]
    %v148 = vld [vmem:[#allocation2 + $0x3c0] sm:$0xff]
    %v149 = vld [vmem:[#allocation2 + $0x3c8] sm:$0xff]
    %v150 = vld [vmem:[#allocation2 + $0x3d0] sm:$0xff]
    %v151 = vld [vmem:[#allocation2 + $0x3d8] sm:$0xff]
    %v152 = vld [vmem:[#allocation2 + $0x3e0] sm:$0xff]
    %v153 = vld [vmem:[#allocation2 + $0x3e8] sm:$0xff]
    %v154 = vld [vmem:[#allocation2 + $0x3f0] sm:$0xff]
    %v155 = vld [vmem:[#allocation2 + $0x3f8] sm:$0xff]
    %v156 = vld [vmem:[#allocation2 + $0x400] sm:$0xff]
    %v157 = vld [vmem:[#allocation2 + $0x408] sm:$0xff]
    %v158 = vld [vmem:[#allocation2 + $0x410] sm:$0xff]
    %v159 = vld [vmem:[#allocation2 + $0x418] sm:$0xff]
    %v160 = vld [vmem:[#allocation2 + $0x420] sm:$0xff]
    %v161 = vld [vmem:[#allocation2 + $0x428] sm:$0xff]
    %v162 = vld [vmem:[#allocation2 + $0x430] sm:$0xff]
    %v163 = vld [vmem:[#allocation2 + $0x438] sm:$0xff]
    %v164 = vld [vmem:[#allocation2 + $0x440] sm:$0xff]
    %v165 = vld [vmem:[#allocation2 + $0x448] sm:$0xff]
    %v166 = vld [vmem:[#allocation2 + $0x450] sm:$0xff]
    %v167 = vld [vmem:[#allocation2 + $0x458] sm:$0xff]
    %v168 = vld [vmem:[#allocation2 + $0x460] sm:$0xff]
    %v169 = vld [vmem:[#allocation2 + $0x468] sm:$0xff]
    %v170 = vld [vmem:[#allocation2 + $0x470] sm:$0xff]
    %v171 = vld [vmem:[#allocation2 + $0x478] sm:$0xff]
    %v172 = vld [vmem:[#allocation2 + $0x480] sm:$0xff]
    %v173 = vld [vmem:[#allocation2 + $0x488] sm:$0xff]
    %v174 = vld [vmem:[#allocation2 + $0x490] sm:$0xff]
    %v175 = vld [vmem:[#allocation2 + $0x498] sm:$0xff]
    %v176 = vld [vmem:[#allocation2 + $0x4a0] sm:$0xff]
    %v177 = vld [vmem:[#allocation2 + $0x4a8] sm:$0xff]
    %v178 = vld [vmem:[#allocation2 + $0x4b0] sm:$0xff]
    %v179 = vld [vmem:[#allocation2 + $0x4b8] sm:$0xff]
    %v180 = vld [vmem:[%s1] sm:$0xff]
    %v181 = vld [vmem:[%s1 + $0x8] sm:$0xff]
    %v182 = vld [vmem:[%s1 + $0x10] sm:$0xff]
    %v183 = vld [vmem:[%s1 + $0x18] sm:$0xff]
    %v184 = vld [vmem:[%s1 + $0x20] sm:$0xff]
    %v185 = vld [vmem:[%s1 + $0x28] sm:$0xff]
    %v186 = vld [vmem:[%s1 + $0x30] sm:$0xff]
    %v187 = vld [vmem:[%s1 + $0x38] sm:$0xff]
    %v188 = vld [vmem:[%s1 + $0x40] sm:$0xff]
    %v189 = vld [vmem:[%s1 + $0x48] sm:$0xff]
    %v190 = vld [vmem:[%s1 + $0x50] sm:$0xff]
    %v191 = vld [vmem:[%s1 + $0x58] sm:$0xff]
    %v192 = vld [vmem:[%s1 + $0x60] sm:$0xff]
    %v193 = vld [vmem:[%s1 + $0x68] sm:$0xff]
    %v194 = vld [vmem:[%s1 + $0x70] sm:$0xff]
    %v195 = vld [vmem:[%s1 + $0x78] sm:$0xff]
    %v196 = vld [vmem:[%s1 + $0x80] sm:$0xff]
    %v197 = vld [vmem:[%s1 + $0x88] sm:$0xff]
    %v198 = vld [vmem:[%s1 + $0x90] sm:$0xff]
    %v199 = vld [vmem:[%s1 + $0x98] sm:$0xff]
    %v200 = vld [vmem:[%s1 + $0xa0] sm:$0xff]
    %v201 = vld [vmem:[%s1 + $0xa8] sm:$0xff]
    %v202 = vld [vmem:[%s1 + $0xb0] sm:$0xff]
    %v203 = vld [vmem:[%s1 + $0xb8] sm:$0xff]
    %v204 = vld [vmem:[%s1 + $0xc0] sm:$0xff]
    %v205 = vld [vmem:[%s1 + $0xc8] sm:$0xff]
    %v206 = vld [vmem:[%s1 + $0xd0] sm:$0xff]
    %v207 = vld [vmem:[%s1 + $0xd8] sm:$0xff]
    %v208 = vld [vmem:[%s1 + $0xe0] sm:$0xff]
    %v209 = vld [vmem:[%s1 + $0xe8] sm:$0xff]
    %v210 = vld [vmem:[%s1 + $0xf0] sm:$0xff]
    %v211 = vld [vmem:[%s1 + $0xf8] sm:$0xff]
    %v212 = vld [vmem:[%s1 + $0x100] sm:$0xff]
    %v213 = vld [vmem:[%s1 + $0x108] sm:$0xff]
    %v214 = vld [vmem:[%s1 + $0x110] sm:$0xff]
    %v215 = vld [vmem:[%s1 + $0x118] sm:$0xff]
    %v216 = vld [vmem:[%s1 + $0x120] sm:$0xff]
    %v217 = vld [vmem:[%s1 + $0x128] sm:$0xff]
    %v218 = vld [vmem:[%s1 + $0x130] sm:$0xff]
    %v219 = vld [vmem:[%s1 + $0x138] sm:$0xff]
    %v220 = vld [vmem:[%s1 + $0x140] sm:$0xff]
    %v221 = vld [vmem:[%s1 + $0x148] sm:$0xff]
    %v222 = vld [vmem:[%s1 + $0x150] sm:$0xff]
    %v223 = vld [vmem:[%s1 + $0x158] sm:$0xff]
    %v224 = vld [vmem:[%s1 + $0x160] sm:$0xff]
    %v225 = vld [vmem:[%s1 + $0x168] sm:$0xff]
    %v226 = vld [vmem:[%s1 + $0x170] sm:$0xff]
    %v227 = vld [vmem:[%s1 + $0x178] sm:$0xff]
    %v228 = vld [vmem:[%s1 + $0x180] sm:$0xff]
    %v229 = vld [vmem:[%s1 + $0x188] sm:$0xff]
    %v230 = vld [vmem:[%s1 + $0x190] sm:$0xff]
    %v231 = vld [vmem:[%s1 + $0x198] sm:$0xff]
    %v232 = vld [vmem:[%s1 + $0x1a0] sm:$0xff]
    %v233 = vld [vmem:[%s1 + $0x1a8] sm:$0xff]
    %v234 = vld [vmem:[%s1 + $0x1b0] sm:$0xff]
    %v235 = vld [vmem:[%s1 + $0x1b8] sm:$0xff]
    %v236 = vld [vmem:[%s1 + $0x1c0] sm:$0xff]
    %v237 = vld [vmem:[%s1 + $0x1c8] sm:$0xff]
    %v238 = vld [vmem:[%s1 + $0x1d0] sm:$0xff]
    %v239 = vld [vmem:[%s1 + $0x1d8] sm:$0xff]
    %v240 = vld [vmem:[%s1 + $0x1e0] sm:$0xff]
    %v241 = vld [vmem:[%s1 + $0x1e8] sm:$0xff]
    %v242 = vld [vmem:[%s1 + $0x1f0] sm:$0xff]
    %v243 = vld [vmem:[%s1 + $0x1f8] sm:$0xff]
    %v244 = vld [vmem:[%s1 + $0x200] sm:$0xff]
    %v245 = vld [vmem:[%s1 + $0x208] sm:$0xff]
    %v246 = vld [vmem:[%s1 + $0x210] sm:$0xff]
    %v247 = vld [vmem:[%s1 + $0x218] sm:$0xff]
    %v248 = vld [vmem:[%s1 + $0x220] sm:$0xff]
    %v249 = vld [vmem:[%s1 + $0x228] sm:$0xff]
    %v250 = vld [vmem:[%s1 + $0x230] sm:$0xff]
    %v251 = vld [vmem:[%s1 + $0x238] sm:$0xff]
    %v252 = vld [vmem:[%s1 + $0x240] sm:$0xff]
    %v253 = vld [vmem:[%s1 + $0x248] sm:$0xff]
    %v254 = vld [vmem:[%s1 + $0x250] sm:$0xff]
    %v255 = vld [vmem:[%s1 + $0x258] sm:$0xff]
    %v256 = vadd.f32 %v28, %v180
    %v257 = vadd.f32 %v29, %v181
    %v258 = vadd.f32 %v30, %v182
    %v259 = vadd.f32 %v31, %v183
    %v260 = vadd.f32 %v32, %v184
    %v261 = vadd.f32 %v33, %v185
    %v262 = vadd.f32 %v34, %v186
    %v263 = vadd.f32 %v35, %v187
    %v264 = vadd.f32 %v36, %v188
    %v265 = vadd.f32 %v37, %v189
    %v266 = vadd.f32 %v38, %v190
    %v267 = vadd.f32 %v39, %v191
    %v268 = vadd.f32 %v40, %v192
    %v269 = vadd.f32 %v41, %v193
    %v270 = vadd.f32 %v42, %v194
    %v271 = vadd.f32 %v43, %v195
    %v272 = vadd.f32 %v44, %v196
    %v273 = vadd.f32 %v45, %v197
    %v274 = vadd.f32 %v46, %v198
    %v275 = vadd.f32 %v47, %v199
    %v276 = vadd.f32 %v48, %v200
    %v277 = vadd.f32 %v49, %v201
    %v278 = vadd.f32 %v50, %v202
    %v279 = vadd.f32 %v51, %v203
    %v280 = vadd.f32 %v52, %v204
    %v281 = vadd.f32 %v53, %v205
    %v282 = vadd.f32 %v54, %v206
    %v283 = vadd.f32 %v55, %v207
    %v284 = vadd.f32 %v56, %v208
    %v285 = vadd.f32 %v57, %v209
    %v286 = vadd.f32 %v58, %v210
    %v287 = vadd.f32 %v59, %v211
    %v288 = vadd.f32 %v60, %v212
    %v289 = vadd.f32 %v61, %v213
    %v290 = vadd.f32 %v62, %v214
    %v291 = vadd.f32 %v63, %v215
    %v292 = vadd.f32 %v64, %v216
    %v293 = vadd.f32 %v65, %v217
    %v294 = vadd.f32 %v66, %v218
    %v295 = vadd.f32 %v67, %v219
    %v296 = vadd.f32 %v68, %v220
    %v297 = vadd.f32 %v69, %v221
    %v298 = vadd.f32 %v70, %v222
    %v299 = vadd.f32 %v71, %v223
    %v300 = vadd.f32 %v72, %v224
    %v301 = vadd.f32 %v73, %v225
    %v302 = vadd.f32 %v74, %v226
    %v303 = vadd.f32 %v75, %v227
    %v304 = vadd.f32 %v76, %v228
    %v305 = vadd.f32 %v77, %v229
    %v306 = vadd.f32 %v78, %v230
    %v307 = vadd.f32 %v79, %v231
    %v308 = vadd.f32 %v80, %v232
    %v309 = vadd.f32 %v81, %v233
    %v310 = vadd.f32 %v82, %v234
    %v311 = vadd.f32 %v83, %v235
    %v312 = vadd.f32 %v84, %v236
    %v313 = vadd.f32 %v85, %v237
    %v314 = vadd.f32 %v86, %v238
    %v315 = vadd.f32 %v87, %v239
    %v316 = vadd.f32 %v88, %v240
    %v317 = vadd.f32 %v89, %v241
    %v318 = vadd.f32 %v90, %v242
    %v319 = vadd.f32 %v91, %v243
    %v320 = vadd.f32 %v92, %v244
    %v321 = vadd.f32 %v93, %v245
    %v322 = vadd.f32 %v94, %v246
    %v323 = vadd.f32 %v95, %v247
    %v324 = vadd.f32 %v96, %v248
    %v325 = vadd.f32 %v97, %v249
    %v326 = vadd.f32 %v98, %v250
    %v327 = vadd.f32 %v99, %v251
    %v328 = vadd.f32 %v100, %v252
    %v329 = vadd.f32 %v101, %v253
    %v330 = vadd.f32 %v102, %v254
    %v331 = vadd.f32 %v103, %v255
    %v332 = vadd.f32 %v104, %v180
    %v333 = vadd.f32 %v105, %v181
    %v334 = vadd.f32 %v106, %v182
    %v335 = vadd.f32 %v107, %v183
    %v336 = vadd.f32 %v108, %v184
    %v337 = vadd.f32 %v109, %v185
    %v338 = vadd.f32 %v110, %v186
    %v339 = vadd.f32 %v111, %v187
    %v340 = vadd.f32 %v112, %v188
    %v341 = vadd.f32 %v113, %v189
    %v342 = vadd.f32 %v114, %v190
    %v343 = vadd.f32 %v115, %v191
    %v344 = vadd.f32 %v116, %v192
    %v345 = vadd.f32 %v117, %v193
    %v346 = vadd.f32 %v118, %v194
    %v347 = vadd.f32 %v119, %v195
    %v348 = vadd.f32 %v120, %v196
    %v349 = vadd.f32 %v121, %v197
    %v350 = vadd.f32 %v122, %v198
    %v351 = vadd.f32 %v123, %v199
    %v352 = vadd.f32 %v124, %v200
    %v353 = vadd.f32 %v125, %v201
    %v354 = vadd.f32 %v126, %v202
    %v355 = vadd.f32 %v127, %v203
    %v356 = vadd.f32 %v128, %v204
    %v357 = vadd.f32 %v129, %v205
    %v358 = vadd.f32 %v130, %v206
    %v359 = vadd.f32 %v131, %v207
    %v360 = vadd.f32 %v132, %v208
    %v361 = vadd.f32 %v133, %v209
    %v362 = vadd.f32 %v134, %v210
    %v363 = vadd.f32 %v135, %v211
    %v364 = vadd.f32 %v136, %v212
    %v365 = vadd.f32 %v137, %v213
    %v366 = vadd.f32 %v138, %v214
    %v367 = vadd.f32 %v139, %v215
    %v368 = vadd.f32 %v140, %v216
    %v369 = vadd.f32 %v141, %v217
    %v370 = vadd.f32 %v142, %v218
    %v371 = vadd.f32 %v143, %v219
    %v372 = vadd.f32 %v144, %v220
    %v373 = vadd.f32 %v145, %v221
    %v374 = vadd.f32 %v146, %v222
    %v375 = vadd.f32 %v147, %v223
    %v376 = vadd.f32 %v148, %v224
    %v377 = vadd.f32 %v149, %v225
    %v378 = vadd.f32 %v150, %v226
    %v379 = vadd.f32 %v151, %v227
    %v380 = vadd.f32 %v152, %v228
    %v381 = vadd.f32 %v153, %v229
    %v382 = vadd.f32 %v154, %v230
    %v383 = vadd.f32 %v155, %v231
    %v384 = vadd.f32 %v156, %v232
    %v385 = vadd.f32 %v157, %v233
    %v386 = vadd.f32 %v158, %v234
    %v387 = vadd.f32 %v159, %v235
    %v388 = vadd.f32 %v160, %v236
    %v389 = vadd.f32 %v161, %v237
    %v390 = vadd.f32 %v162, %v238
    %v391 = vadd.f32 %v163, %v239
    %v392 = vadd.f32 %v164, %v240
    %v393 = vadd.f32 %v165, %v241
    %v394 = vadd.f32 %v166, %v242
    %v395 = vadd.f32 %v167, %v243
    %v396 = vadd.f32 %v168, %v244
    %v397 = vadd.f32 %v169, %v245
    %v398 = vadd.f32 %v170, %v246
    %v399 = vadd.f32 %v171, %v247
    %v400 = vadd.f32 %v172, %v248
    %v401 = vadd.f32 %v173, %v249
    %v402 = vadd.f32 %v174, %v250
    %v403 = vadd.f32 %v175, %v251
    %v404 = vadd.f32 %v176, %v252
    %v405 = vadd.f32 %v177, %v253
    %v406 = vadd.f32 %v178, %v254
    %v407 = vadd.f32 %v179, %v255
    %408 = vst [vmem:[#allocation5] sm:$0xff] %v256
    %409 = vst [vmem:[#allocation5 + $0x8] sm:$0xff] %v257
    %410 = vst [vmem:[#allocation5 + $0x10] sm:$0xff] %v258
    %411 = vst [vmem:[#allocation5 + $0x18] sm:$0xff] %v259
    %412 = vst [vmem:[#allocation5 + $0x20] sm:$0xff] %v260
    %413 = vst [vmem:[#allocation5 + $0x28] sm:$0xff] %v261
    %414 = vst [vmem:[#allocation5 + $0x30] sm:$0xff] %v262
    %415 = vst [vmem:[#allocation5 + $0x38] sm:$0xff] %v263
    %416 = vst [vmem:[#allocation5 + $0x40] sm:$0xff] %v264
    %417 = vst [vmem:[#allocation5 + $0x48] sm:$0xff] %v265
    %418 = vst [vmem:[#allocation5 + $0x50] sm:$0xff] %v266
    %419 = vst [vmem:[#allocation5 + $0x58] sm:$0xff] %v267
    %420 = vst [vmem:[#allocation5 + $0x60] sm:$0xff] %v268
    %421 = vst [vmem:[#allocation5 + $0x68] sm:$0xff] %v269
    %422 = vst [vmem:[#allocation5 + $0x70] sm:$0xff] %v270
    %423 = vst [vmem:[#allocation5 + $0x78] sm:$0xff] %v271
    %424 = vst [vmem:[#allocation5 + $0x80] sm:$0xff] %v272
    %425 = vst [vmem:[#allocation5 + $0x88] sm:$0xff] %v273
    %426 = vst [vmem:[#allocation5 + $0x90] sm:$0xff] %v274
    %427 = vst [vmem:[#allocation5 + $0x98] sm:$0xff] %v275
    %428 = vst [vmem:[#allocation5 + $0xa0] sm:$0xff] %v276
    %429 = vst [vmem:[#allocation5 + $0xa8] sm:$0xff] %v277
    %430 = vst [vmem:[#allocation5 + $0xb0] sm:$0xff] %v278
    %431 = vst [vmem:[#allocation5 + $0xb8] sm:$0xff] %v279
    %432 = vst [vmem:[#allocation5 + $0xc0] sm:$0xff] %v280
    %433 = vst [vmem:[#allocation5 + $0xc8] sm:$0xff] %v281
    %434 = vst [vmem:[#allocation5 + $0xd0] sm:$0xff] %v282
    %435 = vst [vmem:[#allocation5 + $0xd8] sm:$0xff] %v283
    %436 = vst [vmem:[#allocation5 + $0xe0] sm:$0xff] %v284
    %437 = vst [vmem:[#allocation5 + $0xe8] sm:$0xff] %v285
    %438 = vst [vmem:[#allocation5 + $0xf0] sm:$0xff] %v286
    %439 = vst [vmem:[#allocation5 + $0xf8] sm:$0xff] %v287
    %440 = vst [vmem:[#allocation5 + $0x100] sm:$0xff] %v288
    %441 = vst [vmem:[#allocation5 + $0x108] sm:$0xff] %v289
    %442 = vst [vmem:[#allocation5 + $0x110] sm:$0xff] %v290
    %443 = vst [vmem:[#allocation5 + $0x118] sm:$0xff] %v291
    %444 = vst [vmem:[#allocation5 + $0x120] sm:$0xff] %v292
    %445 = vst [vmem:[#allocation5 + $0x128] sm:$0xff] %v293
    %446 = vst [vmem:[#allocation5 + $0x130] sm:$0xff] %v294
    %447 = vst [vmem:[#allocation5 + $0x138] sm:$0xff] %v295
    %448 = vst [vmem:[#allocation5 + $0x140] sm:$0xff] %v296
    %449 = vst [vmem:[#allocation5 + $0x148] sm:$0xff] %v297
    %450 = vst [vmem:[#allocation5 + $0x150] sm:$0xff] %v298
    %451 = vst [vmem:[#allocation5 + $0x158] sm:$0xff] %v299
    %452 = vst [vmem:[#allocation5 + $0x160] sm:$0xff] %v300
    %453 = vst [vmem:[#allocation5 + $0x168] sm:$0xff] %v301
    %454 = vst [vmem:[#allocation5 + $0x170] sm:$0xff] %v302
    %455 = vst [vmem:[#allocation5 + $0x178] sm:$0xff] %v303
    %456 = vst [vmem:[#allocation5 + $0x180] sm:$0xff] %v304
    %457 = vst [vmem:[#allocation5 + $0x188] sm:$0xff] %v305
    %458 = vst [vmem:[#allocation5 + $0x190] sm:$0xff] %v306
    %459 = vst [vmem:[#allocation5 + $0x198] sm:$0xff] %v307
    %460 = vst [vmem:[#allocation5 + $0x1a0] sm:$0xff] %v308
    %461 = vst [vmem:[#allocation5 + $0x1a8] sm:$0xff] %v309
    %462 = vst [vmem:[#allocation5 + $0x1b0] sm:$0xff] %v310
    %463 = vst [vmem:[#allocation5 + $0x1b8] sm:$0xff] %v311
    %464 = vst [vmem:[#allocation5 + $0x1c0] sm:$0xff] %v312
    %465 = vst [vmem:[#allocation5 + $0x1c8] sm:$0xff] %v313
    %466 = vst [vmem:[#allocation5 + $0x1d0] sm:$0xff] %v314
    %467 = vst [vmem:[#allocation5 + $0x1d8] sm:$0xff] %v315
    %468 = vst [vmem:[#allocation5 + $0x1e0] sm:$0xff] %v316
    %469 = vst [vmem:[#allocation5 + $0x1e8] sm:$0xff] %v317
    %470 = vst [vmem:[#allocation5 + $0x1f0] sm:$0xff] %v318
    %471 = vst [vmem:[#allocation5 + $0x1f8] sm:$0xff] %v319
    %472 = vst [vmem:[#allocation5 + $0x200] sm:$0xff] %v320
    %473 = vst [vmem:[#allocation5 + $0x208] sm:$0xff] %v321
    %474 = vst [vmem:[#allocation5 + $0x210] sm:$0xff] %v322
    %475 = vst [vmem:[#allocation5 + $0x218] sm:$0xff] %v323
    %476 = vst [vmem:[#allocation5 + $0x220] sm:$0xff] %v324
    %477 = vst [vmem:[#allocation5 + $0x228] sm:$0xff] %v325
    %478 = vst [vmem:[#allocation5 + $0x230] sm:$0xff] %v326
    %479 = vst [vmem:[#allocation5 + $0x238] sm:$0xff] %v327
    %480 = vst [vmem:[#allocation5 + $0x240] sm:$0xff] %v328
    %481 = vst [vmem:[#allocation5 + $0x248] sm:$0xff] %v329
    %482 = vst [vmem:[#allocation5 + $0x250] sm:$0xff] %v330
    %vm483 = vcmask 490496
    %484 = vst.msk [vmem:[#allocation5 + $0x258] sm:$0xff] %vm483, %v331
    %485 = vst [vmem:[#allocation5 + $0x260] sm:$0xff] %v332
    %486 = vst [vmem:[#allocation5 + $0x268] sm:$0xff] %v333
    %487 = vst [vmem:[#allocation5 + $0x270] sm:$0xff] %v334
    %488 = vst [vmem:[#allocation5 + $0x278] sm:$0xff] %v335
    %489 = vst [vmem:[#allocation5 + $0x280] sm:$0xff] %v336
    %490 = vst [vmem:[#allocation5 + $0x288] sm:$0xff] %v337
    %491 = vst [vmem:[#allocation5 + $0x290] sm:$0xff] %v338
    %492 = vst [vmem:[#allocation5 + $0x298] sm:$0xff] %v339
    %493 = vst [vmem:[#allocation5 + $0x2a0] sm:$0xff] %v340
    %494 = vst [vmem:[#allocation5 + $0x2a8] sm:$0xff] %v341
    %495 = vst [vmem:[#allocation5 + $0x2b0] sm:$0xff] %v342
    %496 = vst [vmem:[#allocation5 + $0x2b8] sm:$0xff] %v343
    %497 = vst [vmem:[#allocation5 + $0x2c0] sm:$0xff] %v344
    %498 = vst [vmem:[#allocation5 + $0x2c8] sm:$0xff] %v345
    %499 = vst [vmem:[#allocation5 + $0x2d0] sm:$0xff] %v346
    %500 = vst [vmem:[#allocation5 + $0x2d8] sm:$0xff] %v347
    %501 = vst [vmem:[#allocation5 + $0x2e0] sm:$0xff] %v348
    %502 = vst [vmem:[#allocation5 + $0x2e8] sm:$0xff] %v349
    %503 = vst [vmem:[#allocation5 + $0x2f0] sm:$0xff] %v350
    %504 = vst [vmem:[#allocation5 + $0x2f8] sm:$0xff] %v351
    %505 = vst [vmem:[#allocation5 + $0x300] sm:$0xff] %v352
    %506 = vst [vmem:[#allocation5 + $0x308] sm:$0xff] %v353
    %507 = vst [vmem:[#allocation5 + $0x310] sm:$0xff] %v354
    %508 = vst [vmem:[#allocation5 + $0x318] sm:$0xff] %v355
    %509 = vst [vmem:[#allocation5 + $0x320] sm:$0xff] %v356
    %510 = vst [vmem:[#allocation5 + $0x328] sm:$0xff] %v357
    %511 = vst [vmem:[#allocation5 + $0x330] sm:$0xff] %v358
    %512 = vst [vmem:[#allocation5 + $0x338] sm:$0xff] %v359
    %513 = vst [vmem:[#allocation5 + $0x340] sm:$0xff] %v360
    %514 = vst [vmem:[#allocation5 + $0x348] sm:$0xff] %v361
    %515 = vst [vmem:[#allocation5 + $0x350] sm:$0xff] %v362
    %516 = vst [vmem:[#allocation5 + $0x358] sm:$0xff] %v363
    %517 = vst [vmem:[#allocation5 + $0x360] sm:$0xff] %v364
    %518 = vst [vmem:[#allocation5 + $0x368] sm:$0xff] %v365
    %519 = vst [vmem:[#allocation5 + $0x370] sm:$0xff] %v366
    %520 = vst [vmem:[#allocation5 + $0x378] sm:$0xff] %v367
    %521 = vst [vmem:[#allocation5 + $0x380] sm:$0xff] %v368
    %522 = vst [vmem:[#allocation5 + $0x388] sm:$0xff] %v369
    %523 = vst [vmem:[#allocation5 + $0x390] sm:$0xff] %v370
    %524 = vst [vmem:[#allocation5 + $0x398] sm:$0xff] %v371
    %525 = vst [vmem:[#allocation5 + $0x3a0] sm:$0xff] %v372
    %526 = vst [vmem:[#allocation5 + $0x3a8] sm:$0xff] %v373
    %527 = vst [vmem:[#allocation5 + $0x3b0] sm:$0xff] %v374
    %528 = vst [vmem:[#allocation5 + $0x3b8] sm:$0xff] %v375
    %529 = vst [vmem:[#allocation5 + $0x3c0] sm:$0xff] %v376
    %530 = vst [vmem:[#allocation5 + $0x3c8] sm:$0xff] %v377
    %531 = vst [vmem:[#allocation5 + $0x3d0] sm:$0xff] %v378
    %532 = vst [vmem:[#allocation5 + $0x3d8] sm:$0xff] %v379
    %533 = vst [vmem:[#allocation5 + $0x3e0] sm:$0xff] %v380
    %534 = vst [vmem:[#allocation5 + $0x3e8] sm:$0xff] %v381
    %535 = vst [vmem:[#allocation5 + $0x3f0] sm:$0xff] %v382
    %536 = vst [vmem:[#allocation5 + $0x3f8] sm:$0xff] %v383
    %537 = vst [vmem:[#allocation5 + $0x400] sm:$0xff] %v384
    %538 = vst [vmem:[#allocation5 + $0x408] sm:$0xff] %v385
    %539 = vst [vmem:[#allocation5 + $0x410] sm:$0xff] %v386
    %540 = vst [vmem:[#allocation5 + $0x418] sm:$0xff] %v387
    %541 = vst [vmem:[#allocation5 + $0x420] sm:$0xff] %v388
    %542 = vst [vmem:[#allocation5 + $0x428] sm:$0xff] %v389
    %543 = vst [vmem:[#allocation5 + $0x430] sm:$0xff] %v390
    %544 = vst [vmem:[#allocation5 + $0x438] sm:$0xff] %v391
    %545 = vst [vmem:[#allocation5 + $0x440] sm:$0xff] %v392
    %546 = vst [vmem:[#allocation5 + $0x448] sm:$0xff] %v393
    %547 = vst [vmem:[#allocation5 + $0x450] sm:$0xff] %v394
    %548 = vst [vmem:[#allocation5 + $0x458] sm:$0xff] %v395
    %549 = vst [vmem:[#allocation5 + $0x460] sm:$0xff] %v396
    %550 = vst [vmem:[#allocation5 + $0x468] sm:$0xff] %v397
    %551 = vst [vmem:[#allocation5 + $0x470] sm:$0xff] %v398
    %552 = vst [vmem:[#allocation5 + $0x478] sm:$0xff] %v399
    %553 = vst [vmem:[#allocation5 + $0x480] sm:$0xff] %v400
    %554 = vst [vmem:[#allocation5 + $0x488] sm:$0xff] %v401
    %555 = vst [vmem:[#allocation5 + $0x490] sm:$0xff] %v402
    %556 = vst [vmem:[#allocation5 + $0x498] sm:$0xff] %v403
    %557 = vst [vmem:[#allocation5 + $0x4a0] sm:$0xff] %v404
    %558 = vst [vmem:[#allocation5 + $0x4a8] sm:$0xff] %v405
    %559 = vst [vmem:[#allocation5 + $0x4b0] sm:$0xff] %v406
    %560 = vst.msk [vmem:[#allocation5 + $0x4b8] sm:$0xff] %vm483, %v407
    // Predicated region
    $region14: #{tpu_custom_call.1} parent=1 // pred_check
      _
    $region15: #{tpu_custom_call.1} parent=1 // pred_check_branch
      %562 = sbr.rel (0) target = $region17
    $region16: #{tpu_custom_call.1} parent=1 // pred_region
      %564 = vsyncadd [#allocation4], 0
      %s565 = sshll.u32 [#allocation5], 4
      %s566 = int_to_ptr.vmem [resolvable:$true] %s565
      %s567 = sshll.u32 %s2, 4
      %s568 = int_to_ptr.hbm [resolvable:$true] %s567
      %573 = dma.vmem_to_hbm [thread:$0]  %s566, 19456, %s568, [#allocation4], 9728, 9728, 608
    $region17: #{tpu_custom_call.1} parent=1 // pred_fallthru
      _
    // Predicated region
    $region18: #{tpu_custom_call.1} parent=1 // pred_check
      _
    $region19: #{tpu_custom_call.1} parent=1 // pred_check_branch
      %575 = sbr.rel (0) target = $region21
    $region20: #{tpu_custom_call.1} parent=1 // pred_region
      %577 = dma.done [#allocation4], 19456
    $region21: #{tpu_custom_call.1} parent=1 // pred_fallthru
      _
    %578 = vsyncpa [#allocation3], 1
    %579 = vsyncpa [#allocation4], 1

</llo_original>
